<compile_context>
chip_gen: v6e
topology: v6e:2x2x1
jax: 0.10.0
libtpu: 0.0.40
codegen_flags: <defaults>
</compile_context>

<pallas_src>
import jax
import jax.numpy as jnp
from jax.experimental import pallas as pl
from jax.experimental.pallas import tpu as pltpu

_SCALE_OUT = 1.7159
_SCALE_IN = 0.666  # matches the PyTorch module (not the canonical 2/3)


def _lecun_kernel(x_ref, o_ref):
    # Elementwise hot path: VPU mul + EUP tanh + VPU mul.
    x = x_ref[...]
    o_ref[...] = (_SCALE_OUT * jnp.tanh(_SCALE_IN * x)).astype(o_ref.dtype)


def lecun(x: jax.Array, *, tile_bytes: int = 2 << 20) -> jax.Array:
    """Apply 1.7159 * tanh(0.666 * x) elementwise via a Pallas TPU kernel."""
    orig_shape = x.shape
    dt = x.dtype
    n = x.size
    if n == 0:
        return x

    LANES = 128
    itemsize = jnp.dtype(dt).itemsize
    # Sublane packing: 8 rows for 32-bit, 16 for 16-bit, 32 for 8-bit dtypes.
    packing = max(8, 32 // itemsize)

    rows = pl.cdiv(n, LANES)
    rows_min = pl.cdiv(rows, packing) * packing  # rows rounded up to packing

    # ~tile_bytes per block (default 2 MiB), a multiple of the packing factor,
    # and never larger than the whole (padded) slab.
    target_rows = max(packing, (tile_bytes // (LANES * itemsize)) // packing * packing)
    tr = min(target_rows, rows_min)

    needs_pad = (n != rows * LANES) or (rows % packing != 0)
    if needs_pad:
        # Single pad on the flat 1-D array (tanh(0) = 0, tail sliced off later).
        rows_pad = rows_min
        flat = jnp.pad(jnp.ravel(x), (0, rows_pad * LANES - n))
        x2d = flat.reshape(rows_pad, LANES)
    else:
        # Zero-copy fast path: no pad, no tail slice.
        rows_pad = rows
        x2d = x.reshape(rows, LANES)

    # Ragged last block (if any) is masked by Pallas; tile size never shrinks.
    grid = (pl.cdiv(rows_pad, tr),)

    # Input + output are each double-buffered -> ~4x tile bytes of VMEM needed.
    tile_vmem = tr * LANES * itemsize
    vmem_limit = int(min(32 << 20, max(16 << 20, 6 * tile_vmem)))

    out2d = pl.pallas_call(
        _lecun_kernel,
        out_shape=jax.ShapeDtypeStruct((rows_pad, LANES), dt),
        grid_spec=pltpu.PrefetchScalarGridSpec(
            num_scalar_prefetch=0,
            grid=grid,
            in_specs=[pl.BlockSpec((tr, LANES), lambda i: (i, 0))],
            out_specs=pl.BlockSpec((tr, LANES), lambda i: (i, 0)),
        ),
        compiler_params=pltpu.CompilerParams(
            dimension_semantics=("parallel",),
            vmem_limit_bytes=vmem_limit,
        ),
        cost_estimate=pl.CostEstimate(
            flops=2 * n,
            transcendentals=n,
            bytes_accessed=2 * n * itemsize,
        ),
    )(x2d)

    if needs_pad:
        return out2d.reshape(-1)[:n].reshape(orig_shape)
    return out2d.reshape(orig_shape)


def lecun_ref(x: jax.Array) -> jax.Array:
    return _SCALE_OUT * jnp.tanh(_SCALE_IN * x)


if __name__ == "__main__":
    key = jax.random.PRNGKey(0)

    # NCHW activation, lane-aligned size (exercises zero-copy fast path).
    x_aligned = jax.random.normal(key, (2, 4, 16, 16), dtype=jnp.float32)
    y_aligned = jax.block_until_ready(lecun(x_aligned))
    assert y_aligned.shape == x_aligned.shape and y_aligned.dtype == x_aligned.dtype
    assert jnp.allclose(y_aligned, lecun_ref(x_aligned), atol=1e-6, rtol=1e-6), (
        "mismatch vs reference (aligned path)"
    )

    # Awkward size (exercises the single-pad ragged path).
    x_ragged = jax.random.normal(jax.random.PRNGKey(1), (3, 5, 7, 11), dtype=jnp.float32)
    y_ragged = jax.block_until_ready(lecun(x_ragged))
    assert y_ragged.shape == x_ragged.shape and y_ragged.dtype == x_ragged.dtype
    assert jnp.allclose(y_ragged, lecun_ref(x_ragged), atol=1e-6, rtol=1e-6), (
        "mismatch vs reference (ragged path)"
    )

    print("KERNEL_OK")
</pallas_src>

<mosaic_0001>
module attributes {stable_mosaic.version = 11 : i64} {
  func.func @_lecun_kernel(%arg0: i32, %arg1: memref<16x128xf32, #tpu.memory_space<vmem>>, %arg2: memref<16x128xf32, #tpu.memory_space<vmem>>) attributes {dimension_semantics = [#tpu.dimension_semantics<parallel>], iteration_bounds = array<i64: 1>, scalar_prefetch = 0 : i64, scratch_operands = 0 : i64, tpu.core_type = #tpu.core_type<tc>, window_params = [{transform_indices = @transform_0, window_bounds = array<i64: 16, 128>}, {transform_indices = @transform_1, window_bounds = array<i64: 16, 128>}]} {
    %c0 = arith.constant 0 : index
    %c0_0 = arith.constant 0 : index
    %0 = vector.load %arg1[%c0, %c0_0] : memref<16x128xf32, #tpu.memory_space<vmem>>, vector<16x128xf32>
    %cst = arith.constant 6.660000e-01 : f32
    %1 = vector.broadcast %cst : f32 to vector<16x128xf32>
    %2 = arith.mulf %1, %0 : vector<16x128xf32>
    %3 = math.tanh %2 : vector<16x128xf32>
    %cst_1 = arith.constant 1.715900e+00 : f32
    %4 = vector.broadcast %cst_1 : f32 to vector<16x128xf32>
    %5 = arith.mulf %4, %3 : vector<16x128xf32>
    %c0_2 = arith.constant 0 : index
    %c0_3 = arith.constant 0 : index
    %6 = vector.load %arg2[%c0_2, %c0_3] : memref<16x128xf32, #tpu.memory_space<vmem>>, vector<16x128xf32>
    tpu.vector_store %arg2[%c0_2, %c0_3], %5 {strides = array<i32>} : memref<16x128xf32, #tpu.memory_space<vmem>>, vector<16x128xf32>,
    return
  }
  func.func @transform_0(%arg0: i32) -> (i32, i32) {
    %c0_i32 = arith.constant 0 : i32
    %c0_i32_0 = arith.constant 0 : i32
    return %arg0, %c0_i32 : i32, i32
  }
  func.func @transform_1(%arg0: i32) -> (i32, i32) {
    %c0_i32 = arith.constant 0 : i32
    %c0_i32_0 = arith.constant 0 : i32
    return %arg0, %c0_i32 : i32, i32
  }
}

</mosaic_0001>

<llo_original>
// kernel: tpu_custom_call.1
$region0: #{tpu_custom_call.1}
  #allocation0 [shape = 'u32[]', space=smem, size = 0x4, offset = 0x4, fixed_abs, tag = 'smem constant byte address 0x4 - core index']
  #allocation1 [shape = 'u32[144,128]{1,0:T(1,128)}', space=vmem, size = 0x12000, scoped, tag = 'internal scratch']
  %s0 = inlined_call_operand.hbm [shape: f32[16,128], index: 0, kind: input, shape index: {}]
  %s1 = inlined_call_operand.hbm [shape: f32[16,128], index: 1, kind: output, shape index: {}]
  %s2 = sld [smem:[#allocation0]]
  $region18: #{tpu_custom_call.1} parent=0
    _
  %s4 = ssub.s32 1, %s2
  %s5 = scalar_select 0, %s4, %s2
  $region1: #{tpu_custom_call.1} parent=0
    #allocation2 [shape = 'u8[8192]{0}', space=vmem, size = 0x2000, scoped, tag = 'input window, operand 0, single buffered']
    #allocation3 [shape = 's32[1]{0}', space=sflag, size = 0x4, scoped, tag = 'scoped memory for tpu_custom_call.1']
    #allocation4 [shape = 's32[1]{0}', space=sflag, size = 0x4, scoped, tag = 'scoped memory for tpu_custom_call.1']
    #allocation5 [shape = 'u8[8192]{0}', space=vmem, size = 0x2000, scoped, tag = 'output window, operand 0, single buffered']
    %6 = vsyncpa [#allocation3], 0
    %7 = vsyncpa [#allocation4], 0
    // Predicated region
    $region2: #{tpu_custom_call.1} parent=1 // pred_check
      _
    $region3: #{tpu_custom_call.1} parent=1 // pred_check_branch
      %9 = sbr.rel (0) target = $region5
    $region4: #{tpu_custom_call.1} parent=1 // pred_region
      %s11 = ssub.s32 256, 256
      %12 = vsyncadd [#allocation3], %s11
      %s13 = sshll.u32 [#allocation2], 4
      %s14 = int_to_ptr.vmem [resolvable:$true] %s13
      %19 = dma.hbm_to_vmem [thread:$0]  %s0, 256, %s14, [#allocation3], 128, 128, 8
    $region5: #{tpu_custom_call.1} parent=1 // pred_fallthru
      _
    // Predicated region
    $region6: #{tpu_custom_call.1} parent=1 // pred_check
      _
    $region7: #{tpu_custom_call.1} parent=1 // pred_check_branch
      %21 = sbr.rel (0) target = $region9
    $region8: #{tpu_custom_call.1} parent=1 // pred_region
      %22 = dma.done [#allocation3], 256
    $region9: #{tpu_custom_call.1} parent=1 // pred_fallthru
      _
    %v23 = vld [vmem:[#allocation2] sm:$0xff]
    %v24 = vld [vmem:[#allocation2 + $0x8] sm:$0xff]
    %v25 = vmul.f32 %v23, 0.666
    %v26 = vmul.f32 %v24, 0.666
    %v27 = vtanh.pop %v25
    %v28 = vtanh.pop %v26
    %v29 = vmul.f32 %v27, 1.7159
    %v30 = vmul.f32 %v28, 1.7159
    %31 = vst [vmem:[#allocation5] sm:$0xff] %v29
    %32 = vst [vmem:[#allocation5 + $0x8] sm:$0xff] %v30
    // Predicated region
    $region10: #{tpu_custom_call.1} parent=1 // pred_check
      _
    $region11: #{tpu_custom_call.1} parent=1 // pred_check_branch
      %34 = sbr.rel (0) target = $region13
    $region12: #{tpu_custom_call.1} parent=1 // pred_region
      %s36 = ssub.s32 256, 256
      %37 = vsyncadd [#allocation4], %s36
      %s38 = sshll.u32 [#allocation5], 4
      %s39 = int_to_ptr.vmem [resolvable:$true] %s38
      %44 = dma.vmem_to_hbm [thread:$0]  %s39, 256, %s1, [#allocation4], 128, 128, 8
    $region13: #{tpu_custom_call.1} parent=1 // pred_fallthru
      _
    // Predicated region
    $region14: #{tpu_custom_call.1} parent=1 // pred_check
      _
    $region15: #{tpu_custom_call.1} parent=1 // pred_check_branch
      %46 = sbr.rel (0) target = $region17
    $region16: #{tpu_custom_call.1} parent=1 // pred_region
      %47 = dma.done [#allocation4], 256
    $region17: #{tpu_custom_call.1} parent=1 // pred_fallthru
      _
    %48 = vsyncpa [#allocation3], 1
    %49 = vsyncpa [#allocation4], 1

</llo_original>
